<compile_context>
chip_gen: v5e
topology: v5e:2x2
jax: 0.10.0
libtpu: 0.0.40
codegen_flags: <defaults>
</compile_context>

<pallas_src>
import functools

import jax
import jax.numpy as jnp
from jax.experimental import pallas as pl
from jax.experimental.pallas import tpu as pltpu


# --------------------------------------------------------------------------
# Shared in-kernel compute
# --------------------------------------------------------------------------
def _mlp_on_pairwise_diff(x_i, x_all, w1, b1, w2, b2, mxu_dtype):
    """(TI,B,H),(N,B,H) -> logits (TI*N*B, C) in f32 via flattened matmuls."""
    ti, b, h = x_i.shape
    n = x_all.shape[0]
    # Pairwise difference on the VPU, kept in f32 (v5e has no bf16 VPU).
    diff = (x_i[:, None, :, :].astype(jnp.float32)
            - x_all[None, :, :, :].astype(jnp.float32))          # (TI, N, B, H)
    m = ti * n * b
    diff2d = diff.reshape(m, h)                                  # flat M dim for the MXU
    hid = jnp.dot(diff2d.astype(mxu_dtype), w1.astype(mxu_dtype),
                  preferred_element_type=jnp.float32)            # Linear(H->C)
    hid = jnp.maximum(hid + b1.astype(jnp.float32), 0.0)         # ReLU (+ eval dropout = id)
    out = jnp.dot(hid.astype(mxu_dtype), w2.astype(mxu_dtype),
                  preferred_element_type=jnp.float32)            # Linear(C->C)
    return out + b2.astype(jnp.float32)                          # (TI*N*B, C)


# --------------------------------------------------------------------------
# Optimized kernel: TI row-nodes per step, lane-dense slab output
# --------------------------------------------------------------------------
def _edges_kernel_slab(x_i_ref, x_ref, w1_ref, b1_ref, w2_ref, b2_ref, o_ref,
                       *, mxu_dtype):
    ti = x_i_ref.shape[0]
    n, b, _ = x_ref.shape
    c = w1_ref.shape[1]
    y = _mlp_on_pairwise_diff(x_i_ref[...], x_ref[...], w1_ref[...], b1_ref[...],
                              w2_ref[...], b2_ref[...], mxu_dtype)
    # Lane-dense store: (TI*N*B, C) -> (TI, N*B*C), so the out_spec minor dim
    # is N*B*C instead of C (unmasked vst, one contiguous writeback DMA).
    o_ref[...] = y.reshape(ti, n * b * c).astype(o_ref.dtype)


# --------------------------------------------------------------------------
# Conservative fallback kernel (previously validated structure)
# --------------------------------------------------------------------------
def _edges_kernel_rowwise(x_i_ref, x_ref, w1_ref, b1_ref, w2_ref, b2_ref, o_ref,
                          *, mxu_dtype):
    # x_i_ref: (1, B, H); x_ref: (N, B, H); o_ref: (1, N, B, C)
    diff = (x_i_ref[...].astype(jnp.float32) - x_ref[...].astype(jnp.float32))
    h = jnp.einsum('nbh,hc->nbc', diff.astype(mxu_dtype),
                   w1_ref[...].astype(mxu_dtype),
                   preferred_element_type=jnp.float32)
    h = jnp.maximum(h + b1_ref[...].astype(jnp.float32), 0.0)
    y = jnp.einsum('nbc,cd->nbd', h.astype(mxu_dtype),
                   w2_ref[...].astype(mxu_dtype),
                   preferred_element_type=jnp.float32)
    y = y + b2_ref[...].astype(jnp.float32)
    o_ref[...] = y[None].astype(o_ref.dtype)


# --------------------------------------------------------------------------
# Row-tile selection
# --------------------------------------------------------------------------
def _choose_row_tile(n, b, h, c, itemsize, *, target_rows=256,
                     vmem_budget_bytes=20 * 1024 * 1024):
    """Pick how many row-nodes to process per grid step.

    ti must divide n and (for the lane-dense output block) be a multiple of 8
    or equal n.  The working-set estimate is kept well under 32 MiB so the
    same tiling works on v5e/v6e (128 MiB VMEM) and v7x (64 MiB VMEM).
    Prefer the smallest ti whose flattened matmul M dim (ti*n*b) fills the
    MXU; otherwise take the largest tile that fits.
    """
    candidates = []
    for ti in range(1, n + 1):
        if n % ti:
            continue
        if ti != n and ti % 8:
            continue
        work = (2 * ti * b * h * itemsize          # row tile (double buffered)
                + n * b * h * itemsize             # full features (single buffered)
                + 2 * ti * n * b * c * itemsize    # output slab tile (double buffered)
                + ti * n * b * (h + 2 * c) * 4)    # f32 temporaries (diff, hidden, logits)
        if work <= vmem_budget_bytes:
            candidates.append(ti)
    if not candidates:
        # TODO(synk): add a j-axis grid dimension for very large num_nodes
        #             (needed to stay within v7x's 64 MiB VMEM).
        candidates = [min(t for t in range(1, n + 1)
                          if n % t == 0 and (t == n or t % 8 == 0))]
    filling = [t for t in candidates if t * n * b >= target_rows]
    return min(filling) if filling else max(candidates)


# --------------------------------------------------------------------------
# pallas_call wrappers
# --------------------------------------------------------------------------
def _forward_optimized(args, n, b, h, c, mxu_dtype, out_dtype, row_tile,
                       compiler_params):
    features = args[0]
    itemsize = features.dtype.itemsize
    ti = row_tile if row_tile is not None else _choose_row_tile(n, b, h, c, itemsize)
    grid = (n // ti,)
    slab_w = n * b * c

    # Grid-invariant operands (constant index_map): single-buffered.
    invariant = dict(pipeline_mode=pl.Buffered(1))
    in_specs = [
        pl.BlockSpec((ti, b, h), lambda i: (i, 0, 0)),               # row-node tile
        pl.BlockSpec((n, b, h), lambda i: (0, 0, 0), **invariant),   # all features
        pl.BlockSpec((h, c), lambda i: (0, 0), **invariant),         # W1
        pl.BlockSpec((1, c), lambda i: (0, 0), **invariant),         # b1
        pl.BlockSpec((c, c), lambda i: (0, 0), **invariant),         # W2
        pl.BlockSpec((1, c), lambda i: (0, 0), **invariant),         # b2
    ]
    out2d = pl.pallas_call(
        functools.partial(_edges_kernel_slab, mxu_dtype=mxu_dtype),
        out_shape=jax.ShapeDtypeStruct((n, slab_w), out_dtype),
        grid_spec=pltpu.PrefetchScalarGridSpec(
            num_scalar_prefetch=0,
            grid=grid,
            in_specs=in_specs,
            out_specs=pl.BlockSpec((ti, slab_w), lambda i: (i, 0)),
        ),
        compiler_params=compiler_params,
    )(*args)
    # Metadata-only reshape back to the PyTorch output layout.
    return out2d.reshape(n, n, b, c)


def _forward_fallback(args, n, b, h, c, mxu_dtype, out_dtype, compiler_params):
    return pl.pallas_call(
        functools.partial(_edges_kernel_rowwise, mxu_dtype=mxu_dtype),
        out_shape=jax.ShapeDtypeStruct((n, n, b, c), out_dtype),
        grid_spec=pltpu.PrefetchScalarGridSpec(
            num_scalar_prefetch=0,
            grid=(n,),
            in_specs=[
                pl.BlockSpec((1, b, h), lambda i: (i, 0, 0)),
                pl.BlockSpec((n, b, h), lambda i: (0, 0, 0)),
                pl.BlockSpec((h, c), lambda i: (0, 0)),
                pl.BlockSpec((1, c), lambda i: (0, 0)),
                pl.BlockSpec((c, c), lambda i: (0, 0)),
                pl.BlockSpec((1, c), lambda i: (0, 0)),
            ],
            out_specs=pl.BlockSpec((1, n, b, c), lambda i: (i, 0, 0, 0)),
        ),
        compiler_params=compiler_params,
    )(*args)


def edges_class_forward(features, w1, b1, w2, b2, *, mxu_dtype=None,
                        out_dtype=None, row_tile=None):
    """features: (N, B, H), w1: (H, C), b1: (C,), w2: (C, C), b2: (C,)
    -> all_logits: (N, N, B, C).

    mxu_dtype: dtype for the matmul inputs (e.g. jnp.bfloat16 on v6e/v7x);
               accumulation is always f32.  Defaults to features.dtype.
    out_dtype: output dtype (bf16 halves the dominant N^2*B*C writeback if the
               consumer allows it).  Defaults to features.dtype.
    """
    n, b, h = features.shape
    c = w1.shape[1]
    if mxu_dtype is None:
        mxu_dtype = features.dtype
    if out_dtype is None:
        out_dtype = features.dtype
    b1_2d = b1.reshape(1, c)
    b2_2d = b2.reshape(1, c)
    args = (features, features, w1, b1_2d, w2, b2_2d)

    compiler_params = pltpu.CompilerParams(
        dimension_semantics=("parallel",),     # i-tiles are independent (v7x: 2 TCs)
        vmem_limit_bytes=32 * 1024 * 1024,     # fits v5e/v6e/v7x scoped VMEM
    )

    try:
        return _forward_optimized(args, n, b, h, c, mxu_dtype, out_dtype,
                                  row_tile, compiler_params)
    except Exception:
        # Older Mosaic without the minor-dim reshape / Buffered(1) support:
        # use the previously-validated conservative kernel.
        return _forward_fallback(args, n, b, h, c, mxu_dtype, out_dtype,
                                 compiler_params)


# --------------------------------------------------------------------------
# Pure-JAX reference (eval-mode PyTorch forward)
# --------------------------------------------------------------------------
def edges_class_reference(features, w1, b1, w2, b2, mxu_dtype=None):
    if mxu_dtype is None:
        mxu_dtype = features.dtype
    diff = (features[:, None, :, :].astype(jnp.float32)
            - features[None, :, :, :].astype(jnp.float32))        # (N, N, B, H)
    hid = jnp.einsum('ijbh,hc->ijbc', diff.astype(mxu_dtype),
                     w1.astype(mxu_dtype), preferred_element_type=jnp.float32)
    hid = jnp.maximum(hid + b1.astype(jnp.float32), 0.0)
    y = jnp.einsum('ijbc,cd->ijbd', hid.astype(mxu_dtype),
                   w2.astype(mxu_dtype), preferred_element_type=jnp.float32)
    return (y + b2.astype(jnp.float32)).astype(features.dtype)


if __name__ == "__main__":
    # Shapes consistent with the module: features (num_nodes, batch, hidden_dim).
    num_nodes, batch_size, hidden_dim, num_classes = 8, 2, 32, 8

    key = jax.random.PRNGKey(0)
    k_x, k_w1, k_b1, k_w2, k_b2 = jax.random.split(key, 5)

    features = jax.random.normal(k_x, (num_nodes, batch_size, hidden_dim),
                                 dtype=jnp.float32)

    # PyTorch-style init: U(-1/sqrt(fan_in), 1/sqrt(fan_in)); weights stored as
    # (in, out) == PyTorch weight.T so the kernel computes x @ W.
    lim1 = 1.0 / jnp.sqrt(jnp.float32(hidden_dim))
    lim2 = 1.0 / jnp.sqrt(jnp.float32(num_classes))
    w1 = jax.random.uniform(k_w1, (hidden_dim, num_classes),
                            minval=-lim1, maxval=lim1, dtype=jnp.float32)
    b1 = jax.random.uniform(k_b1, (num_classes,),
                            minval=-lim1, maxval=lim1, dtype=jnp.float32)
    w2 = jax.random.uniform(k_w2, (num_classes, num_classes),
                            minval=-lim2, maxval=lim2, dtype=jnp.float32)
    b2 = jax.random.uniform(k_b2, (num_classes,),
                            minval=-lim2, maxval=lim2, dtype=jnp.float32)

    # Full-precision path (exact-ish parity with the PyTorch fp32 forward).
    out = edges_class_forward(features, w1, b1, w2, b2)
    out = jax.block_until_ready(out)
    ref = edges_class_reference(features, w1, b1, w2, b2)
    assert out.shape == (num_nodes, num_nodes, batch_size, num_classes), out.shape
    assert jnp.allclose(out, ref, atol=1e-4, rtol=1e-4), \
        f"f32 max abs err {jnp.max(jnp.abs(out - ref))}"

    # bf16 MXU-input path (recommended on v6e/v7x); compared against a
    # reference that applies the same bf16 cast at the matmul inputs.
    out_bf16 = edges_class_forward(features, w1, b1, w2, b2,
                                   mxu_dtype=jnp.bfloat16)
    out_bf16 = jax.block_until_ready(out_bf16)
    ref_bf16 = edges_class_reference(features, w1, b1, w2, b2,
                                     mxu_dtype=jnp.bfloat16)
    assert jnp.allclose(out_bf16, ref_bf16, atol=1e-2, rtol=1e-2), \
        f"bf16 max abs err {jnp.max(jnp.abs(out_bf16 - ref_bf16))}"

    print("KERNEL_OK")
</pallas_src>

<mosaic_0001>
module attributes {stable_mosaic.version = 11 : i64} {
  func.func @_edges_kernel_slab(%arg0: i32, %arg1: memref<8x2x32xf32, #tpu.memory_space<vmem>>, %arg2: memref<8x2x32xf32, #tpu.memory_space<vmem>>, %arg3: memref<32x8xf32, #tpu.memory_space<vmem>>, %arg4: memref<1x8xf32, #tpu.memory_space<vmem>>, %arg5: memref<8x8xf32, #tpu.memory_space<vmem>>, %arg6: memref<1x8xf32, #tpu.memory_space<vmem>>, %arg7: memref<8x128xf32, #tpu.memory_space<vmem>>) attributes {dimension_semantics = [#tpu.dimension_semantics<parallel>], iteration_bounds = array<i64: 1>, scalar_prefetch = 0 : i64, scratch_operands = 0 : i64, tpu.core_type = #tpu.core_type<tc>, window_params = [{transform_indices = @transform_0, window_bounds = array<i64: 8, 2, 32>}, {pipeline_mode = #tpu.pipeline_mode<synchronous>, transform_indices = @transform_1, window_bounds = array<i64: 8, 2, 32>}, {pipeline_mode = #tpu.pipeline_mode<synchronous>, transform_indices = @transform_2, window_bounds = array<i64: 32, 8>}, {pipeline_mode = #tpu.pipeline_mode<synchronous>, transform_indices = @transform_3, window_bounds = array<i64: 1, 8>}, {pipeline_mode = #tpu.pipeline_mode<synchronous>, transform_indices = @transform_4, window_bounds = array<i64: 8, 8>}, {pipeline_mode = #tpu.pipeline_mode<synchronous>, transform_indices = @transform_5, window_bounds = array<i64: 1, 8>}, {transform_indices = @transform_6, window_bounds = array<i64: 8, 128>}]} {
    %c0 = arith.constant 0 : index
    %c0_0 = arith.constant 0 : index
    %c0_1 = arith.constant 0 : index
    %0 = vector.load %arg1[%c0, %c0_0, %c0_1] : memref<8x2x32xf32, #tpu.memory_space<vmem>>, vector<8x2x32xf32>
    %c0_2 = arith.constant 0 : index
    %c0_3 = arith.constant 0 : index
    %c0_4 = arith.constant 0 : index
    %1 = vector.load %arg2[%c0_2, %c0_3, %c0_4] : memref<8x2x32xf32, #tpu.memory_space<vmem>>, vector<8x2x32xf32>
    %c0_5 = arith.constant 0 : index
    %c0_6 = arith.constant 0 : index
    %2 = vector.load %arg3[%c0_5, %c0_6] : memref<32x8xf32, #tpu.memory_space<vmem>>, vector<32x8xf32>
    %c0_7 = arith.constant 0 : index
    %c0_8 = arith.constant 0 : index
    %3 = vector.load %arg4[%c0_7, %c0_8] : memref<1x8xf32, #tpu.memory_space<vmem>>, vector<1x8xf32>
    %c0_9 = arith.constant 0 : index
    %c0_10 = arith.constant 0 : index
    %4 = vector.load %arg5[%c0_9, %c0_10] : memref<8x8xf32, #tpu.memory_space<vmem>>, vector<8x8xf32>
    %c0_11 = arith.constant 0 : index
    %c0_12 = arith.constant 0 : index
    %5 = vector.load %arg6[%c0_11, %c0_12] : memref<1x8xf32, #tpu.memory_space<vmem>>, vector<1x8xf32>
    %6 = vector.shape_cast %0 : vector<8x2x32xf32> to vector<8x1x2x32xf32>
    %7 = vector.shape_cast %1 : vector<8x2x32xf32> to vector<1x8x2x32xf32>
    %8 = vector.broadcast %6 : vector<8x1x2x32xf32> to vector<8x8x2x32xf32>
    %9 = vector.broadcast %7 : vector<1x8x2x32xf32> to vector<8x8x2x32xf32>
    %10 = arith.subf %8, %9 : vector<8x8x2x32xf32>
    %11 = vector.shape_cast %10 : vector<8x8x2x32xf32> to vector<128x32xf32>
    %cst = arith.constant dense<0.000000e+00> : vector<128x8xf32>
    %12 = tpu.matmul %11, %2, %cst {dimension_numbers = #tpu.dot_dimension_numbers<[1], [0], [0], [1], [0, 0, 1, 1], [], []>} : vector<128x32xf32>, vector<32x8xf32>, vector<128x8xf32> -> vector<128x8xf32>
    %13 = vector.broadcast %3 : vector<1x8xf32> to vector<128x8xf32>
    %14 = arith.addf %12, %13 : vector<128x8xf32>
    %cst_13 = arith.constant 0.000000e+00 : f32
    %15 = vector.broadcast %cst_13 : f32 to vector<128x8xf32>
    %16 = arith.maximumf %14, %15 : vector<128x8xf32>
    %cst_14 = arith.constant dense<0.000000e+00> : vector<128x8xf32>
    %17 = tpu.matmul %16, %4, %cst_14 {dimension_numbers = #tpu.dot_dimension_numbers<[1], [0], [0], [1], [0, 0, 1, 1], [], []>} : vector<128x8xf32>, vector<8x8xf32>, vector<128x8xf32> -> vector<128x8xf32>
    %18 = vector.broadcast %5 : vector<1x8xf32> to vector<128x8xf32>
    %19 = arith.addf %17, %18 : vector<128x8xf32>
    %20 = vector.shape_cast %19 : vector<128x8xf32> to vector<8x128xf32>
    %c0_15 = arith.constant 0 : index
    %c0_16 = arith.constant 0 : index
    %21 = vector.load %arg7[%c0_15, %c0_16] : memref<8x128xf32, #tpu.memory_space<vmem>>, vector<8x128xf32>
    tpu.vector_store %arg7[%c0_15, %c0_16], %20 {strides = array<i32>} : memref<8x128xf32, #tpu.memory_space<vmem>>, vector<8x128xf32>,
    return
  }
  func.func @transform_0(%arg0: i32) -> (i32, i32, i32) {
    %c0_i32 = arith.constant 0 : i32
    %c0_i32_0 = arith.constant 0 : i32
    %c0_i32_1 = arith.constant 0 : i32
    return %arg0, %c0_i32, %c0_i32_0 : i32, i32, i32
  }
  func.func @transform_1(%arg0: i32) -> (i32, i32, i32) {
    %c0_i32 = arith.constant 0 : i32
    %c0_i32_0 = arith.constant 0 : i32
    %c0_i32_1 = arith.constant 0 : i32
    %c0_i32_2 = arith.constant 0 : i32
    return %c0_i32, %c0_i32_0, %c0_i32_1 : i32, i32, i32
  }
  func.func @transform_2(%arg0: i32) -> (i32, i32) {
    %c0_i32 = arith.constant 0 : i32
    %c0_i32_0 = arith.constant 0 : i32
    %c0_i32_1 = arith.constant 0 : i32
    return %c0_i32, %c0_i32_0 : i32, i32
  }
  func.func @transform_3(%arg0: i32) -> (i32, i32) {
    %c0_i32 = arith.constant 0 : i32
    %c0_i32_0 = arith.constant 0 : i32
    %c0_i32_1 = arith.constant 0 : i32
    return %c0_i32, %c0_i32_0 : i32, i32
  }
  func.func @transform_4(%arg0: i32) -> (i32, i32) {
    %c0_i32 = arith.constant 0 : i32
    %c0_i32_0 = arith.constant 0 : i32
    %c0_i32_1 = arith.constant 0 : i32
    return %c0_i32, %c0_i32_0 : i32, i32
  }
  func.func @transform_5(%arg0: i32) -> (i32, i32) {
    %c0_i32 = arith.constant 0 : i32
    %c0_i32_0 = arith.constant 0 : i32
    %c0_i32_1 = arith.constant 0 : i32
    return %c0_i32, %c0_i32_0 : i32, i32
  }
  func.func @transform_6(%arg0: i32) -> (i32, i32) {
    %c0_i32 = arith.constant 0 : i32
    %c0_i32_0 = arith.constant 0 : i32
    return %arg0, %c0_i32 : i32, i32
  }
}

module attributes {stable_mosaic.version = 11 : i64} {
  func.func @_edges_kernel_rowwise(%arg0: i32, %arg1: memref<1x2x32xf32, #tpu.memory_space<vmem>>, %arg2: memref<8x2x32xf32, #tpu.memory_space<vmem>>, %arg3: memref<32x8xf32, #tpu.memory_space<vmem>>, %arg4: memref<1x8xf32, #tpu.memory_space<vmem>>, %arg5: memref<8x8xf32, #tpu.memory_space<vmem>>, %arg6: memref<1x8xf32, #tpu.memory_space<vmem>>, %arg7: memref<1x8x2x8xf32, #tpu.memory_space<vmem>>) attributes {dimension_semantics = [#tpu.dimension_semantics<parallel>], iteration_bounds = array<i64: 8>, scalar_prefetch = 0 : i64, scratch_operands = 0 : i64, tpu.core_type = #tpu.core_type<tc>, window_params = [{transform_indices = @transform_0, window_bounds = array<i64: 1, 2, 32>}, {pipeline_mode = #tpu.pipeline_mode<synchronous>, transform_indices = @transform_1, window_bounds = array<i64: 8, 2, 32>}, {pipeline_mode = #tpu.pipeline_mode<synchronous>, transform_indices = @transform_2, window_bounds = array<i64: 32, 8>}, {pipeline_mode = #tpu.pipeline_mode<synchronous>, transform_indices = @transform_3, window_bounds = array<i64: 1, 8>}, {pipeline_mode = #tpu.pipeline_mode<synchronous>, transform_indices = @transform_4, window_bounds = array<i64: 8, 8>}, {pipeline_mode = #tpu.pipeline_mode<synchronous>, transform_indices = @transform_5, window_bounds = array<i64: 1, 8>}, {transform_indices = @transform_6, window_bounds = array<i64: 1, 8, 2, 8>}]} {
    %c0 = arith.constant 0 : index
    %c0_0 = arith.constant 0 : index
    %c0_1 = arith.constant 0 : index
    %0 = vector.load %arg1[%c0, %c0_0, %c0_1] : memref<1x2x32xf32, #tpu.memory_space<vmem>>, vector<1x2x32xf32>
    %c0_2 = arith.constant 0 : index
    %c0_3 = arith.constant 0 : index
    %c0_4 = arith.constant 0 : index
    %1 = vector.load %arg2[%c0_2, %c0_3, %c0_4] : memref<8x2x32xf32, #tpu.memory_space<vmem>>, vector<8x2x32xf32>
    %2 = vector.broadcast %0 : vector<1x2x32xf32> to vector<8x2x32xf32>
    %3 = arith.subf %2, %1 : vector<8x2x32xf32>
    %c0_5 = arith.constant 0 : index
    %c0_6 = arith.constant 0 : index
    %4 = vector.load %arg3[%c0_5, %c0_6] : memref<32x8xf32, #tpu.memory_space<vmem>>, vector<32x8xf32>
    "tpu.trace_start"() <{level = 10 : i32, message = "nbh,hc->nbc"}> : () -> ()
    %cst = arith.constant dense<0.000000e+00> : vector<8x2x8xf32>
    %5 = tpu.matmul %3, %4, %cst {dimension_numbers = #tpu.dot_dimension_numbers<[2], [0], [0, 1], [1], [0, 0, 0, 1, 1, 1], [], []>} : vector<8x2x32xf32>, vector<32x8xf32>, vector<8x2x8xf32> -> vector<8x2x8xf32>
    "tpu.trace_stop"() : () -> ()
    %c0_7 = arith.constant 0 : index
    %c0_8 = arith.constant 0 : index
    %6 = vector.load %arg4[%c0_7, %c0_8] : memref<1x8xf32, #tpu.memory_space<vmem>>, vector<1x8xf32>
    %7 = vector.shape_cast %6 : vector<1x8xf32> to vector<1x1x8xf32>
    %8 = vector.broadcast %7 : vector<1x1x8xf32> to vector<8x2x8xf32>
    %9 = arith.addf %5, %8 : vector<8x2x8xf32>
    %cst_9 = arith.constant 0.000000e+00 : f32
    %10 = vector.broadcast %cst_9 : f32 to vector<8x2x8xf32>
    %11 = arith.maximumf %9, %10 : vector<8x2x8xf32>
    %c0_10 = arith.constant 0 : index
    %c0_11 = arith.constant 0 : index
    %12 = vector.load %arg5[%c0_10, %c0_11] : memref<8x8xf32, #tpu.memory_space<vmem>>, vector<8x8xf32>
    "tpu.trace_start"() <{level = 10 : i32, message = "nbc,cd->nbd"}> : () -> ()
    %cst_12 = arith.constant dense<0.000000e+00> : vector<8x2x8xf32>
    %13 = tpu.matmul %11, %12, %cst_12 {dimension_numbers = #tpu.dot_dimension_numbers<[2], [0], [0, 1], [1], [0, 0, 0, 1, 1, 1], [], []>} : vector<8x2x8xf32>, vector<8x8xf32>, vector<8x2x8xf32> -> vector<8x2x8xf32>
    "tpu.trace_stop"() : () -> ()
    %c0_13 = arith.constant 0 : index
    %c0_14 = arith.constant 0 : index
    %14 = vector.load %arg6[%c0_13, %c0_14] : memref<1x8xf32, #tpu.memory_space<vmem>>, vector<1x8xf32>
    %15 = vector.shape_cast %14 : vector<1x8xf32> to vector<1x1x8xf32>
    %16 = vector.broadcast %15 : vector<1x1x8xf32> to vector<8x2x8xf32>
    %17 = arith.addf %13, %16 : vector<8x2x8xf32>
    %18 = vector.shape_cast %17 : vector<8x2x8xf32> to vector<1x8x2x8xf32>
    %c0_15 = arith.constant 0 : index
    %c0_16 = arith.constant 0 : index
    %c0_17 = arith.constant 0 : index
    %c0_18 = arith.constant 0 : index
    %19 = vector.load %arg7[%c0_15, %c0_16, %c0_17, %c0_18] : memref<1x8x2x8xf32, #tpu.memory_space<vmem>>, vector<1x8x2x8xf32>
    tpu.vector_store %arg7[%c0_15, %c0_16, %c0_17, %c0_18], %18 {strides = array<i32>} : memref<1x8x2x8xf32, #tpu.memory_space<vmem>>, vector<1x8x2x8xf32>,
    return
  }
  func.func @transform_0(%arg0: i32) -> (i32, i32, i32) {
    %c0_i32 = arith.constant 0 : i32
    %c0_i32_0 = arith.constant 0 : i32
    %c0_i32_1 = arith.constant 0 : i32
    return %arg0, %c0_i32, %c0_i32_0 : i32, i32, i32
  }
  func.func @transform_1(%arg0: i32) -> (i32, i32, i32) {
    %c0_i32 = arith.constant 0 : i32
    %c0_i32_0 = arith.constant 0 : i32
    %c0_i32_1 = arith.constant 0 : i32
    %c0_i32_2 = arith.constant 0 : i32
    return %c0_i32, %c0_i32_0, %c0_i32_1 : i32, i32, i32
  }
  func.func @transform_2(%arg0: i32) -> (i32, i32) {
    %c0_i32 = arith.constant 0 : i32
    %c0_i32_0 = arith.constant 0 : i32
    %c0_i32_1 = arith.constant 0 : i32
    return %c0_i32, %c0_i32_0 : i32, i32
  }
  func.func @transform_3(%arg0: i32) -> (i32, i32) {
    %c0_i32 = arith.constant 0 : i32
    %c0_i32_0 = arith.constant 0 : i32
    %c0_i32_1 = arith.constant 0 : i32
    return %c0_i32, %c0_i32_0 : i32, i32
  }
  func.func @transform_4(%arg0: i32) -> (i32, i32) {
    %c0_i32 = arith.constant 0 : i32
    %c0_i32_0 = arith.constant 0 : i32
    %c0_i32_1 = arith.constant 0 : i32
    return %c0_i32, %c0_i32_0 : i32, i32
  }
  func.func @transform_5(%arg0: i32) -> (i32, i32) {
    %c0_i32 = arith.constant 0 : i32
    %c0_i32_0 = arith.constant 0 : i32
    %c0_i32_1 = arith.constant 0 : i32
    return %c0_i32, %c0_i32_0 : i32, i32
  }
  func.func @transform_6(%arg0: i32) -> (i32, i32, i32, i32) {
    %c0_i32 = arith.constant 0 : i32
    %c0_i32_0 = arith.constant 0 : i32
    %c0_i32_1 = arith.constant 0 : i32
    %c0_i32_2 = arith.constant 0 : i32
    return %arg0, %c0_i32, %c0_i32_0, %c0_i32_1 : i32, i32, i32, i32
  }
}

</mosaic_0001>

<llo_original>
// kernel: tpu_custom_call.1
$region0: #{tpu_custom_call.1}
  #allocation0 [shape = 'u32[]', space=smem, size = 0x4, offset = 0x4, fixed_abs, tag = 'smem constant byte address 0x4 - core index']
  #allocation1 [shape = 'u32[72,128]{1,0:T(1,128)}', space=vmem, size = 0x9000, scoped, tag = 'internal scratch']
  %s0 = inlined_call_operand.vmem [shape: f32[8,2,32], index: 0, kind: input, shape index: {}]
  %s1 = inlined_call_operand.vmem [shape: f32[8,2,32], index: 1, kind: input, shape index: {}]
  %s2 = inlined_call_operand.vmem [shape: f32[32,8], index: 2, kind: input, shape index: {}]
  %s3 = inlined_call_operand.vmem [shape: f32[1,8], index: 3, kind: input, shape index: {}]
  %s4 = inlined_call_operand.vmem [shape: f32[8,8], index: 4, kind: input, shape index: {}]
  %s5 = inlined_call_operand.vmem [shape: f32[1,8], index: 5, kind: input, shape index: {}]
  %s6 = inlined_call_operand.hbm [shape: f32[8,8,2,8], index: 6, kind: output, shape index: {}]
  %s7 = sld [smem:[#allocation0]]
  $region57: #{tpu_custom_call.1} parent=0
    _
  %s9 = ssub.s32 1, %s7
  %s10 = scalar_select 0, %s9, %s7
  $region1: #{tpu_custom_call.1} parent=0
    #allocation2 [shape = 'u8[16384]{0}', space=vmem, size = 0x4000, scoped, tag = 'output window, operand 0']
    #allocation3 [shape = 's32[2]{0}', space=sflag, size = 0x8, scoped, tag = 'scoped memory for tpu_custom_call.1']
    %11 = vsyncpa [#allocation3], 0
    %s12 = scalar_lea.sflag [#allocation3], 1
    %13 = vsyncpa %s12, 0
    loop: start=0, step=1, limit=10
    $region2: #{tpu_custom_call.1} parent=1 // loop_pre_header
      _
    $region3: #{tpu_custom_call.1} parent=1 // loop_header
      %s15 = sphi 0, %s19
      %p16 = scmp.ge.s32.totalorder %s15, 10
      %s25 = sphi 0, %s27
      %s28 = sphi 0, %s25
      %s29 = sphi 0, %s28
      %s45 = sphi 0, %s29
      %s49 = sphi 0, %s49
      %s51 = sphi 0, %s49
      %s52 = sphi 0, %s51
      %s66 = sphi 0, %s52
      %s70 = sphi 0, %s70
      %s72 = sphi 0, %s70
      %s73 = sphi 0, %s72
      %s87 = sphi 0, %s73
      %s91 = sphi 0, %s91
      %s93 = sphi 0, %s91
      %s94 = sphi 0, %s93
      %s108 = sphi 0, %s94
      %s112 = sphi 0, %s112
      %s114 = sphi 0, %s112
      %s115 = sphi 0, %s114
      %s129 = sphi 0, %s115
      %s133 = sphi 0, %s133
      %s135 = sphi 0, %s133
      %s136 = sphi 0, %s135
      %s150 = sphi 0, %s136
      %s156 = sphi 0, %s158
      %s159 = sphi 0, %s156
      %s160 = sphi 0, %s159
      %s176 = sphi 0, %s160
    $region4: #{tpu_custom_call.1} parent=1 // loop_header_branch
      %18 = sbr.rel (%p16) target = $region8
    $region5: #{tpu_custom_call.1} parent=1 // loop_body
      %s20 = ssub.s32 %s15, 1
      %s21 = ssub.s32 %s15, 2
      %s22 = sadd.s32 %s15, 1
      %s23 = ssub.s32 %s15, %s22
      %p24 = scmp.eq.s32.totalorder %s23, 0
      %s26 = sadd.s32 %s25, 1
      %s27 = scalar_select %p24, %s25, %s26
      %p30 = pneg %p24
      %p31 = scmp.eq.s32.totalorder %s15, 7
      %p32 = por %p30, %p31
      %p33 = scmp.ne.s32.totalorder %s25, %s28
      %p34 = scmp.eq.s32.totalorder %s15, 0
      %p35 = por %p33, %p34
      %p36 = scmp.ne.s32.totalorder %s25, %s28
      %p37 = scmp.eq.s32.totalorder %s20, 7
      %p38 = por %p36, %p37
      %p39 = scmp.ne.s32.totalorder %s28, %s29
      %p40 = scmp.eq.s32.totalorder %s20, 0
      %p41 = por %p39, %p40
      %p42 = scmp.ne.s32.totalorder %s28, %s29
      %p43 = scmp.eq.s32.totalorder %s21, 7
      %p44 = por %p42, %p43
      %p46 = scmp.ne.s32.totalorder %s29, %s45
      %p47 = scmp.eq.s32.totalorder %s21, 0
      %p48 = por %p46, %p47
      %s50 = sadd.s32 %s49, 1
      %p53 = scmp.eq.s32.totalorder %s15, 7
      %p54 = scmp.ne.s32.totalorder %s49, %s51
      %p55 = scmp.eq.s32.totalorder %s15, 0
      %p56 = por %p54, %p55
      %p57 = scmp.ne.s32.totalorder %s49, %s51
      %p58 = scmp.eq.s32.totalorder %s20, 7
      %p59 = por %p57, %p58
      %p60 = scmp.ne.s32.totalorder %s51, %s52
      %p61 = scmp.eq.s32.totalorder %s20, 0
      %p62 = por %p60, %p61
      %p63 = scmp.ne.s32.totalorder %s51, %s52
      %p64 = scmp.eq.s32.totalorder %s21, 7
      %p65 = por %p63, %p64
      %p67 = scmp.ne.s32.totalorder %s52, %s66
      %p68 = scmp.eq.s32.totalorder %s21, 0
      %p69 = por %p67, %p68
      %s71 = sadd.s32 %s70, 1
      %p74 = scmp.eq.s32.totalorder %s15, 7
      %p75 = scmp.ne.s32.totalorder %s70, %s72
      %p76 = scmp.eq.s32.totalorder %s15, 0
      %p77 = por %p75, %p76
      %p78 = scmp.ne.s32.totalorder %s70, %s72
      %p79 = scmp.eq.s32.totalorder %s20, 7
      %p80 = por %p78, %p79
      %p81 = scmp.ne.s32.totalorder %s72, %s73
      %p82 = scmp.eq.s32.totalorder %s20, 0
      %p83 = por %p81, %p82
      %p84 = scmp.ne.s32.totalorder %s72, %s73
      %p85 = scmp.eq.s32.totalorder %s21, 7
      %p86 = por %p84, %p85
      %p88 = scmp.ne.s32.totalorder %s73, %s87
      %p89 = scmp.eq.s32.totalorder %s21, 0
      %p90 = por %p88, %p89
      %s92 = sadd.s32 %s91, 1
      %p95 = scmp.eq.s32.totalorder %s15, 7
      %p96 = scmp.ne.s32.totalorder %s91, %s93
      %p97 = scmp.eq.s32.totalorder %s15, 0
      %p98 = por %p96, %p97
      %p99 = scmp.ne.s32.totalorder %s91, %s93
      %p100 = scmp.eq.s32.totalorder %s20, 7
      %p101 = por %p99, %p100
      %p102 = scmp.ne.s32.totalorder %s93, %s94
      %p103 = scmp.eq.s32.totalorder %s20, 0
      %p104 = por %p102, %p103
      %p105 = scmp.ne.s32.totalorder %s93, %s94
      %p106 = scmp.eq.s32.totalorder %s21, 7
      %p107 = por %p105, %p106
      %p109 = scmp.ne.s32.totalorder %s94, %s108
      %p110 = scmp.eq.s32.totalorder %s21, 0
      %p111 = por %p109, %p110
      %s113 = sadd.s32 %s112, 1
      %p116 = scmp.eq.s32.totalorder %s15, 7
      %p117 = scmp.ne.s32.totalorder %s112, %s114
      %p118 = scmp.eq.s32.totalorder %s15, 0
      %p119 = por %p117, %p118
      %p120 = scmp.ne.s32.totalorder %s112, %s114
      %p121 = scmp.eq.s32.totalorder %s20, 7
      %p122 = por %p120, %p121
      %p123 = scmp.ne.s32.totalorder %s114, %s115
      %p124 = scmp.eq.s32.totalorder %s20, 0
      %p125 = por %p123, %p124
      %p126 = scmp.ne.s32.totalorder %s114, %s115
      %p127 = scmp.eq.s32.totalorder %s21, 7
      %p128 = por %p126, %p127
      %p130 = scmp.ne.s32.totalorder %s115, %s129
      %p131 = scmp.eq.s32.totalorder %s21, 0
      %p132 = por %p130, %p131
      %s134 = sadd.s32 %s133, 1
      %p137 = scmp.eq.s32.totalorder %s15, 7
      %p138 = scmp.ne.s32.totalorder %s133, %s135
      %p139 = scmp.eq.s32.totalorder %s15, 0
      %p140 = por %p138, %p139
      %p141 = scmp.ne.s32.totalorder %s133, %s135
      %p142 = scmp.eq.s32.totalorder %s20, 7
      %p143 = por %p141, %p142
      %p144 = scmp.ne.s32.totalorder %s135, %s136
      %p145 = scmp.eq.s32.totalorder %s20, 0
      %p146 = por %p144, %p145
      %p147 = scmp.ne.s32.totalorder %s135, %s136
      %p148 = scmp.eq.s32.totalorder %s21, 7
      %p149 = por %p147, %p148
      %p151 = scmp.ne.s32.totalorder %s136, %s150
      %p152 = scmp.eq.s32.totalorder %s21, 0
      %p153 = por %p151, %p152
      %s154 = ssub.s32 %s15, %s22
      %p155 = scmp.eq.s32.totalorder %s154, 0
      %s157 = sadd.s32 %s156, 1
      %s158 = scalar_select %p155, %s156, %s157
      %p161 = pneg %p155
      %p162 = scmp.eq.s32.totalorder %s15, 7
      %p163 = por %p161, %p162
      %p164 = scmp.ne.s32.totalorder %s156, %s159
      %p165 = scmp.eq.s32.totalorder %s15, 0
      %p166 = por %p164, %p165
      %p167 = scmp.ne.s32.totalorder %s156, %s159
      %p168 = scmp.eq.s32.totalorder %s20, 7
      %p169 = por %p167, %p168
      %p170 = scmp.ne.s32.totalorder %s159, %s160
      %p171 = scmp.eq.s32.totalorder %s20, 0
      %p172 = por %p170, %p171
      %p173 = scmp.ne.s32.totalorder %s159, %s160
      %p174 = scmp.eq.s32.totalorder %s21, 7
      %p175 = por %p173, %p174
      %p177 = scmp.ne.s32.totalorder %s160, %s176
      %p178 = scmp.eq.s32.totalorder %s21, 0
      %p179 = por %p177, %p178
      %p180 = scmp.le.s32.totalorder 1, %s15
      %p181 = scmp.lt.s32.totalorder %s15, 9
      %p182 = pnand %p180, %p181
      %p183 = pneg %p182
      // Predicated region
      $region9: #{tpu_custom_call.1} parent=5 // pred_check
        _
      $region10: #{tpu_custom_call.1} parent=5 // pred_check_branch
        %185 = sbr.rel (%p182) target = $region12
      $region11: #{tpu_custom_call.1} parent=5 // pred_region
        %s186 = ssub.s32 %s15, 1
        // Predicated region
        $region13: #{tpu_custom_call.1} parent=11 // pred_check
          %p187 = pneg %p62
        $region14: #{tpu_custom_call.1} parent=11 // pred_check_branch
          %189 = sbr.rel (%p187) target = $region16
        $region15: #{tpu_custom_call.1} parent=11 // pred_region
          _
        $region16: #{tpu_custom_call.1} parent=11 // pred_fallthru
          _
        // Predicated region
        $region17: #{tpu_custom_call.1} parent=11 // pred_check
          %p190 = pneg %p83
        $region18: #{tpu_custom_call.1} parent=11 // pred_check_branch
          %192 = sbr.rel (%p190) target = $region20
        $region19: #{tpu_custom_call.1} parent=11 // pred_region
          _
        $region20: #{tpu_custom_call.1} parent=11 // pred_fallthru
          _
        // Predicated region
        $region21: #{tpu_custom_call.1} parent=11 // pred_check
          %p193 = pneg %p104
        $region22: #{tpu_custom_call.1} parent=11 // pred_check_branch
          %195 = sbr.rel (%p193) target = $region24
        $region23: #{tpu_custom_call.1} parent=11 // pred_region
          _
        $region24: #{tpu_custom_call.1} parent=11 // pred_fallthru
          _
        // Predicated region
        $region25: #{tpu_custom_call.1} parent=11 // pred_check
          %p196 = pneg %p125
        $region26: #{tpu_custom_call.1} parent=11 // pred_check_branch
          %198 = sbr.rel (%p196) target = $region28
        $region27: #{tpu_custom_call.1} parent=11 // pred_region
          _
        $region28: #{tpu_custom_call.1} parent=11 // pred_fallthru
          _
        // Predicated region
        $region29: #{tpu_custom_call.1} parent=11 // pred_check
          %p199 = pneg %p146
        $region30: #{tpu_custom_call.1} parent=11 // pred_check_branch
          %201 = sbr.rel (%p199) target = $region32
        $region31: #{tpu_custom_call.1} parent=11 // pred_region
          _
        $region32: #{tpu_custom_call.1} parent=11 // pred_fallthru
          _
      $region12: #{tpu_custom_call.1} parent=5 // pred_fallthru
        _
      %p202 = scmp.lt.s32.totalorder %s15, 8
      // Predicated region
      $region33: #{tpu_custom_call.1} parent=5 // pred_check
        %p203 = pneg %p202
      $region34: #{tpu_custom_call.1} parent=5 // pred_check_branch
        %205 = sbr.rel (%p203) target = $region36
      $region35: #{tpu_custom_call.1} parent=5 // pred_region
        // Predicated region
        $region37: #{tpu_custom_call.1} parent=35 // pred_check
          %p206 = pneg %p35
        $region38: #{tpu_custom_call.1} parent=35 // pred_check_branch
          %208 = sbr.rel (%p206) target = $region40
        $region39: #{tpu_custom_call.1} parent=35 // pred_region
          %p209 = scmp.lt.s32.totalorder %s15, 7
          %s210 = scalar_select %p209, %s15, 7
          %s211 = smul.addr %s210, 2
          %s212 = scalar_lea.vmem %s0, %s211
        $region40: #{tpu_custom_call.1} parent=35 // pred_fallthru
          _
      $region36: #{tpu_custom_call.1} parent=5 // pred_fallthru
        _
      %p213 = scmp.le.s32.totalorder 1, %s15
      %p214 = scmp.lt.s32.totalorder %s15, 9
      %p215 = pnand %p213, %p214
      %p216 = pneg %p215
      // Predicated region
      $region41: #{tpu_custom_call.1} parent=5 // pred_check
        _
      $region42: #{tpu_custom_call.1} parent=5 // pred_check_branch
        %218 = sbr.rel (%p215) target = $region44
      $region43: #{tpu_custom_call.1} parent=5 // pred_region
        %s219 = ssub.s32 %s15, 1
        %p220 = scmp.lt.s32.totalorder %s20, 7
        %s221 = scalar_select %p220, %s20, 7
        %s222 = smul.addr %s221, 2
        %s223 = scalar_lea.vmem %s0, %s222
        %p224 = pneg %p41
        %p225 = pneg %p38
        %p226 = pneg %p62
        %p227 = pneg %p59
        %p228 = pneg %p83
        %p229 = pneg %p80
        %p230 = pneg %p104
        %p231 = pneg %p101
        %p232 = pneg %p125
        %p233 = pneg %p122
        %p234 = pneg %p146
        %p235 = pneg %p143
        %p236 = pneg %p172
        %p237 = pneg %p169
        %s238 = sand.u32 %s159, 1
        %s239 = scalar_lea.sflag [#allocation3], %s238
        %s240 = sand.u32 %s159, 1
        %s241 = smul.addr %s240, 16
        %s242 = scalar_lea.vmem [#allocation2], %s241
        %p243 = scmp.lt.s32.totalorder %s20, 7
        %s244 = scalar_select %p243, %s20, 7
        %s245 = smul.addr %s244, 2
        %s246 = scalar_lea.vmem %s0, %s245
        %v247 = vld [vmem:[%s246] sm:$0x3]
        %v248 = vld [vmem:[%s1] sm:$0x3]
        %v249 = vld [vmem:[%s1 + $0x2] sm:$0x3]
        %v250 = vld [vmem:[%s1 + $0x4] sm:$0x3]
        %v251 = vld [vmem:[%s1 + $0x6] sm:$0x3]
        %v252 = vld [vmem:[%s1 + $0x8] sm:$0x3]
        %v253 = vld [vmem:[%s1 + $0xa] sm:$0x3]
        %v254 = vld [vmem:[%s1 + $0xc] sm:$0x3]
        %v255 = vld [vmem:[%s1 + $0xe] sm:$0x3]
        %v256 = vsub.f32 %v247, %v248
        %v257 = vsub.f32 %v247, %v249
        %v258 = vsub.f32 %v247, %v250
        %v259 = vsub.f32 %v247, %v251
        %v260 = vsub.f32 %v247, %v252
        %v261 = vsub.f32 %v247, %v253
        %v262 = vsub.f32 %v247, %v254
        %v263 = vsub.f32 %v247, %v255
        %v264 = vld [vmem:[%s2] sm:$0xff]
        %v265 = vld [vmem:[%s2 + $0x8] sm:$0xff]
        %v266 = vld [vmem:[%s2 + $0x10] sm:$0xff]
        %v267 = vld [vmem:[%s2 + $0x18] sm:$0xff]
        %v268 = vld [vmem:[%s3] sm:$0x1]
        %v270 = vperm.slane %v268, 0
        %279 = vst [vmem:[#allocation1] ss:$4 sm:$0xff] %v256
        %s280 = scalar_lea.vmem [#allocation1], 1
        %281 = vst [vmem:[%s280] ss:$4 sm:$0xff] %v257
        %s282 = scalar_lea.vmem [#allocation1], 2
        %283 = vst [vmem:[%s282] ss:$4 sm:$0xff] %v258
        %s284 = scalar_lea.vmem [#allocation1], 3
        %285 = vst [vmem:[%s284] ss:$4 sm:$0xff] %v259
        %s286 = scalar_lea.vmem [#allocation1], 32
        %287 = vst [vmem:[%s286] ss:$4 sm:$0xff] %v260
        %s288 = scalar_lea.vmem [#allocation1], 33
        %289 = vst [vmem:[%s288] ss:$4 sm:$0xff] %v261
        %s290 = scalar_lea.vmem [#allocation1], 34
        %291 = vst [vmem:[%s290] ss:$4 sm:$0xff] %v262
        %s292 = scalar_lea.vmem [#allocation1], 35
        %293 = vst [vmem:[%s292] ss:$4 sm:$0xff] %v263
        %v294 = vld.sshfl [vmem:[#allocation1] sm:$0xff pattern:$0x73625140]
        %v295 = vld.sshfl [vmem:[#allocation1 + $0x20] sm:$0xff pattern:$0x73625140]
        %296 = vst [vmem:[#allocation1] ss:$4 sm:$0xff] %v270
        %s297 = scalar_lea.vmem [#allocation1], 1
        %298 = vst [vmem:[%s297] ss:$4 sm:$0xff] %v270
        %s299 = scalar_lea.vmem [#allocation1], 2
        %300 = vst [vmem:[%s299] ss:$4 sm:$0xff] %v270
        %s301 = scalar_lea.vmem [#allocation1], 3
        %302 = vst [vmem:[%s301] ss:$4 sm:$0xff] %v270
        %s303 = scalar_lea.vmem [#allocation1], 32
        %304 = vst [vmem:[%s303] ss:$4 sm:$0xff] %v270
        %s305 = scalar_lea.vmem [#allocation1], 33
        %306 = vst [vmem:[%s305] ss:$4 sm:$0xff] %v270
        %s307 = scalar_lea.vmem [#allocation1], 34
        %308 = vst [vmem:[%s307] ss:$4 sm:$0xff] %v270
        %s309 = scalar_lea.vmem [#allocation1], 35
        %310 = vst [vmem:[%s309] ss:$4 sm:$0xff] %v270
        %v311 = vld.sshfl [vmem:[#allocation1] sm:$0xff pattern:$0x73625140]
        %v312 = vld.sshfl [vmem:[#allocation1 + $0x20] sm:$0xff pattern:$0x73625140]
        %vm315 = vcmask 261120
        %v316 = vsel %vm315, %v294, 0
        %v318 = vsel %vm315, %v295, 0
        %320 = vmatpush.msra.mxu0 0.0
        %321 = vmatpush.msra.mxu0 0.0
        %322 = vmatpush.msra.mxu0 0.0
        %323 = vmatpush.msra.mxu0 0.0
        %324 = vmatpush.msra.mxu0 0.0
        %325 = vmatpush.msra.mxu0 0.0
        %326 = vmatpush.msra.mxu0 0.0
        %327 = vmatpush.msra.mxu0 0.0
        %328 = vmatpush.msra.mxu0 0.0
        %329 = vmatpush.msra.mxu0 0.0
        %330 = vmatpush.msra.mxu0 0.0
        %331 = vmatpush.msra.mxu0 0.0
        %332 = vmatpush.msra.mxu0 %v267
        %333 = vmatpush.msra.mxu0 %v266
        %334 = vmatpush.msra.mxu0 %v265
        %335 = vmatpush.msra.mxu0 %v264
        %336 = vmatmul.f32.gmra.mxu0 %v316
        %v337 = vpop.f32.mrf.mxu0
        %v338 = vadd.f32 %v311, %v337
        %339 = vmatmul.f32.gmra.mxu0 %v318
        %v340 = vpop.f32.mrf.mxu0
        %v341 = vadd.f32 %v312, %v340
        %342 = vdwg.mxu0
        %v345 = vrot.slane %v338, 2
        %v346 = vrot.slane %v338, 4
        %v347 = vrot.slane %v338, 6
        %v348 = vrot.slane %v341, 2
        %v349 = vrot.slane %v341, 4
        %v350 = vrot.slane %v341, 6
        %v357 = vmax.f32 %v338, 0.0
        %v358 = vmax.f32 %v345, 0.0
        %v359 = vmax.f32 %v346, 0.0
        %v360 = vmax.f32 %v347, 0.0
        %v361 = vmax.f32 %v341, 0.0
        %v362 = vmax.f32 %v348, 0.0
        %v363 = vmax.f32 %v349, 0.0
        %v364 = vmax.f32 %v350, 0.0
        %v365 = vld [vmem:[%s4] sm:$0xff]
        %v366 = vld [vmem:[%s5] sm:$0x1]
        %v368 = vperm.slane %v366, 0
        %377 = vst [vmem:[#allocation1] ss:$4 sm:$0xff] %v357
        %s378 = scalar_lea.vmem [#allocation1], 1
        %379 = vst [vmem:[%s378] ss:$4 sm:$0xff] %v358
        %s380 = scalar_lea.vmem [#allocation1], 2
        %381 = vst [vmem:[%s380] ss:$4 sm:$0xff] %v359
        %s382 = scalar_lea.vmem [#allocation1], 3
        %383 = vst [vmem:[%s382] ss:$4 sm:$0xff] %v360
        %s384 = scalar_lea.vmem [#allocation1], 32
        %385 = vst [vmem:[%s384] ss:$4 sm:$0xff] %v361
        %s386 = scalar_lea.vmem [#allocation1], 33
        %387 = vst [vmem:[%s386] ss:$4 sm:$0xff] %v362
        %s388 = scalar_lea.vmem [#allocation1], 34
        %389 = vst [vmem:[%s388] ss:$4 sm:$0xff] %v363
        %s390 = scalar_lea.vmem [#allocation1], 35
        %391 = vst [vmem:[%s390] ss:$4 sm:$0xff] %v364
        %v392 = vld.sshfl [vmem:[#allocation1] sm:$0xff pattern:$0x73625140]
        %v393 = vld.sshfl [vmem:[#allocation1 + $0x20] sm:$0xff pattern:$0x73625140]
        %394 = vst [vmem:[#allocation1] ss:$4 sm:$0xff] %v368
        %s395 = scalar_lea.vmem [#allocation1], 1
        %396 = vst [vmem:[%s395] ss:$4 sm:$0xff] %v368
        %s397 = scalar_lea.vmem [#allocation1], 2
        %398 = vst [vmem:[%s397] ss:$4 sm:$0xff] %v368
        %s399 = scalar_lea.vmem [#allocation1], 3
        %400 = vst [vmem:[%s399] ss:$4 sm:$0xff] %v368
        %s401 = scalar_lea.vmem [#allocation1], 32
        %402 = vst [vmem:[%s401] ss:$4 sm:$0xff] %v368
        %s403 = scalar_lea.vmem [#allocation1], 33
        %404 = vst [vmem:[%s403] ss:$4 sm:$0xff] %v368
        %s405 = scalar_lea.vmem [#allocation1], 34
        %406 = vst [vmem:[%s405] ss:$4 sm:$0xff] %v368
        %s407 = scalar_lea.vmem [#allocation1], 35
        %408 = vst [vmem:[%s407] ss:$4 sm:$0xff] %v368
        %v409 = vld.sshfl [vmem:[#allocation1] sm:$0xff pattern:$0x73625140]
        %v410 = vld.sshfl [vmem:[#allocation1 + $0x20] sm:$0xff pattern:$0x73625140]
        %vm413 = vcmask 64512
        %v414 = vsel %vm413, %v392, 0
        %v416 = vsel %vm413, %v393, 0
        %418 = vmatpush.msra.mxu0 0.0
        %419 = vmatpush.msra.mxu0 0.0
        %420 = vmatpush.msra.mxu0 0.0
        %421 = vmatpush.msra.mxu0 0.0
        %422 = vmatpush.msra.mxu0 0.0
        %423 = vmatpush.msra.mxu0 0.0
        %424 = vmatpush.msra.mxu0 0.0
        %425 = vmatpush.msra.mxu0 0.0
        %426 = vmatpush.msra.mxu0 0.0
        %427 = vmatpush.msra.mxu0 0.0
        %428 = vmatpush.msra.mxu0 0.0
        %429 = vmatpush.msra.mxu0 0.0
        %430 = vmatpush.msra.mxu0 0.0
        %431 = vmatpush.msra.mxu0 0.0
        %432 = vmatpush.msra.mxu0 0.0
        %433 = vmatpush.msra.mxu0 %v365
        %434 = vmatmul.f32.gmra.mxu0 %v414
        %v435 = vpop.f32.mrf.mxu0
        %v436 = vadd.f32 %v409, %v435
        %437 = vmatmul.f32.gmra.mxu0 %v416
        %v438 = vpop.f32.mrf.mxu0
        %v439 = vadd.f32 %v410, %v438
        %440 = vdwg.mxu0
        %v443 = vrot.slane %v436, 2
        %v444 = vrot.slane %v436, 4
        %v445 = vrot.slane %v436, 6
        %v446 = vrot.slane %v439, 2
        %v447 = vrot.slane %v439, 4
        %v448 = vrot.slane %v439, 6
        %vm455 = vcmask 58368
        %456 = vst.msk [vmem:[%s242] sm:$0x3] %vm455, %v436
        %457 = vst.msk [vmem:[%s242 + $0x2] sm:$0x3] %vm455, %v443
        %458 = vst.msk [vmem:[%s242 + $0x4] sm:$0x3] %vm455, %v444
        %459 = vst.msk [vmem:[%s242 + $0x6] sm:$0x3] %vm455, %v445
        %460 = vst.msk [vmem:[%s242 + $0x8] sm:$0x3] %vm455, %v439
        %461 = vst.msk [vmem:[%s242 + $0xa] sm:$0x3] %vm455, %v446
        %462 = vst.msk [vmem:[%s242 + $0xc] sm:$0x3] %vm455, %v447
        %463 = vst.msk [vmem:[%s242 + $0xe] sm:$0x3] %vm455, %v448
        %s464 = sand.u32 %s159, 1
        %s465 = scalar_lea.sflag [#allocation3], %s464
        %s466 = sand.u32 %s159, 1
        %s467 = smul.addr %s466, 16
        %s468 = scalar_lea.vmem [#allocation2], %s467
        // Predicated region
        $region45: #{tpu_custom_call.1} parent=43 // pred_check
          %p469 = pneg %p169
        $region46: #{tpu_custom_call.1} parent=43 // pred_check_branch
          %471 = sbr.rel (%p469) target = $region48
        $region47: #{tpu_custom_call.1} parent=43 // pred_region
          %473 = vsyncadd %s465, 0
          %s474 = smul.addr %s20, 8
          %s475 = smul.addr %s474, 2
          %s476 = scalar_lea.hbm %s6, %s475
          %s477 = sshll.u32 %s468, 4
          %s478 = int_to_ptr.vmem [resolvable:$true] %s477
          %s479 = sshll.u32 %s476, 4
          %s480 = int_to_ptr.hbm [resolvable:$true] %s479
          %485 = dma.vmem_to_hbm [thread:$0]  %s478, 256, %s480, %s465, 32, 32, 2
        $region48: #{tpu_custom_call.1} parent=43 // pred_fallthru
          _
      $region44: #{tpu_custom_call.1} parent=5 // pred_fallthru
        _
      %p486 = scmp.le.s32.totalorder 2, %s15
      // Predicated region
      $region49: #{tpu_custom_call.1} parent=5 // pred_check
        %p487 = pneg %p486
      $region50: #{tpu_custom_call.1} parent=5 // pred_check_branch
        %489 = sbr.rel (%p487) target = $region52
      $region51: #{tpu_custom_call.1} parent=5 // pred_region
        %s490 = ssub.s32 %s15, 2
        // Predicated region
        $region53: #{tpu_custom_call.1} parent=51 // pred_check
          %p491 = pneg %p175
        $region54: #{tpu_custom_call.1} parent=51 // pred_check_branch
          %493 = sbr.rel (%p491) target = $region56
        $region55: #{tpu_custom_call.1} parent=51 // pred_region
          %s494 = sand.u32 %s160, 1
          %s495 = scalar_lea.sflag [#allocation3], %s494
          %s496 = sand.u32 %s160, 1
          %s497 = smul.addr %s496, 16
          %s498 = scalar_lea.vmem [#allocation2], %s497
          %500 = dma.done %s495, 256
        $region56: #{tpu_custom_call.1} parent=51 // pred_fallthru
          _
      $region52: #{tpu_custom_call.1} parent=5 // pred_fallthru
        _
    $region6: #{tpu_custom_call.1} parent=1 // loop_footer
      %s19 = sadd.s32 1, %s15
    $region7: #{tpu_custom_call.1} parent=1 // loop_footer_branch
      %14 = sbr.rel target = $region3
    $region8: #{tpu_custom_call.1} parent=1 // loop_exit
      _
    %501 = vsyncpa [#allocation3], 1
    %s502 = scalar_lea.sflag [#allocation3], 1
    %503 = vsyncpa %s502, 1

</llo_original>
